<compile_context>
chip_gen: v7x
topology: tpu7x:2x2x1
jax: 0.10.0
libtpu: 0.0.40
codegen_flags: <defaults>
</compile_context>

<pallas_src>
import jax
import jax.numpy as jnp
from jax.experimental import pallas as pl
from jax.experimental.pallas import tpu as pltpu

# ---- static model / layout constants -------------------------------------------------
IN_F = 10                     # nn.Linear(10, 5)
HID_F = 5
OUT_F = 2                     # nn.Linear(5, 2)

LANES = 128                   # TPU lane width
W1_OFF = 0                    # slab rows [0, 16):    W1 (10 rows used, rest zero)
B1_ROW = 16                   # slab row 16:          b1 in lanes [0, HID_F)
W2_OFF = 24                   # slab rows [24, 152):  W2 zero-padded to a full 128-row K block
B2_ROW = W2_OFF + LANES       # slab row 152:         b2 in lanes [0, OUT_F)
SLAB_ROWS = B2_ROW + 8        # 160 rows total (multiple of 8 sublanes), 80 KiB f32


def mlp_kernel(x_ref, p_ref, o_ref):
    # x_ref : (tb, IN_F)          un-padded input tile (last block dim == full array dim)
    # p_ref : (SLAB_ROWS, LANES)  packed parameter slab, grid-invariant (resident in VMEM)
    # o_ref : (tb, LANES)         lane-dense output slab; lanes >= OUT_F are zero
    x = x_ref[...]

    w1 = p_ref[W1_OFF:W1_OFF + IN_F, :]        # (10, 128)  W1, cols >= HID_F are zero
    b1 = p_ref[B1_ROW:B1_ROW + 1, :]           # (1, 128)   b1, lanes >= HID_F are zero
    w2 = p_ref[W2_OFF:W2_OFF + LANES, :]       # (128, 128) W2 zero-padded
    b2 = p_ref[B2_ROW:B2_ROW + 1, :]           # (1, 128)   b2, lanes >= OUT_F are zero

    # Hidden layer: h = relu(x @ W1 + b1).  Lanes >= HID_F stay exactly zero
    # (zero matmul columns + zero bias lanes + relu).
    h = jnp.dot(x, w1, preferred_element_type=jnp.float32) + b1
    h = jnp.maximum(h, 0.0)

    # Output layer: o = h @ W2 + b2, stored as a full 128-lane slab (unmasked vst).
    o = jnp.dot(h, w2, preferred_element_type=jnp.float32) + b2
    o_ref[...] = o.astype(o_ref.dtype)


def pack_params(w1, b1, w2, b2):
    """Pack W1, b1, W2, b2 into a single (SLAB_ROWS, 128) f32 slab.

    Weight-only and static: call ONCE (off the hot path) and reuse the slab.
    """
    slab = jnp.zeros((SLAB_ROWS, LANES), jnp.float32)
    slab = slab.at[W1_OFF:W1_OFF + IN_F, :HID_F].set(w1.astype(jnp.float32))
    slab = slab.at[B1_ROW, :HID_F].set(b1.reshape(-1).astype(jnp.float32))
    slab = slab.at[W2_OFF:W2_OFF + HID_F, :OUT_F].set(w2.astype(jnp.float32))
    slab = slab.at[B2_ROW, :OUT_F].set(b2.reshape(-1).astype(jnp.float32))
    return slab


def _round_up(n, m):
    return pl.cdiv(n, m) * m


def simple_model_forward(x, slab, *, tb=None):
    """y = relu(x @ W1 + b1) @ W2 + b2 with the pre-packed parameter slab.

    Streams the batch in tb-row tiles; the slab stays resident in VMEM.
    """
    batch = x.shape[0]
    batch8 = _round_up(batch, 8)

    if tb is None:
        # Small batch -> single grid step (no per-step overhead); large batch ->
        # 1024-row tiles (well inside every generation's VMEM budget, incl. v5e's
        # 16 MiB scoped default and v7x's 64 MiB physical), and a multi-step grid
        # so the "parallel" batch axis lands on both v7x TensorCores.
        tb = batch8 if batch8 <= 1024 else 1024
    tb = max(8, _round_up(min(tb, batch8), 8))       # multiple of 8 (f32 sublanes)
    batch_pad = _round_up(batch8, tb)

    xp = x.astype(jnp.float32)
    if batch_pad != batch:
        # Only pad the batch axis (feature axis stays at IN_F = 10, no repack).
        xp = jnp.zeros((batch_pad, IN_F), jnp.float32).at[:batch].set(xp)

    out = pl.pallas_call(
        mlp_kernel,
        out_shape=jax.ShapeDtypeStruct((batch_pad, LANES), jnp.float32),
        grid=(batch_pad // tb,),
        in_specs=[
            # x tile streams over the batch axis; last dim == full array dim (10).
            pl.BlockSpec((tb, IN_F), lambda i: (i, 0)),
            # Parameter slab: grid-invariant block -> fetched once, resident in VMEM.
            pl.BlockSpec((SLAB_ROWS, LANES), lambda i: (0, 0)),
        ],
        # Lane-dense output block -> unmasked full-lane stores every step.
        out_specs=pl.BlockSpec((tb, LANES), lambda i: (i, 0)),
        compiler_params=pltpu.CompilerParams(
            dimension_semantics=("parallel",),   # batch axis shards across TCs (v7x megacore)
        ),
    )(xp, slab)

    # Padded batch rows compute relu(b1) @ W2 + b2 (garbage); sliced away here.
    return out[:batch, :OUT_F].astype(x.dtype)


if __name__ == "__main__":
    key = jax.random.PRNGKey(0)
    k_x, k_w1, k_b1, k_w2, k_b2 = jax.random.split(key, 5)

    batch = 64      # small demo batch; single grid step (batch <= 1024)

    x = jax.random.normal(k_x, (batch, IN_F), dtype=jnp.float32)
    # Deterministic parameter init (PyTorch default is uniform; exact values don't
    # matter for this synthetic kernel, shapes/dtypes do).
    w1 = jax.random.uniform(k_w1, (IN_F, HID_F), jnp.float32, -0.3, 0.3)
    b1 = jax.random.uniform(k_b1, (HID_F,), jnp.float32, -0.3, 0.3)
    w2 = jax.random.uniform(k_w2, (HID_F, OUT_F), jnp.float32, -0.4, 0.4)
    b2 = jax.random.uniform(k_b2, (OUT_F,), jnp.float32, -0.4, 0.4)

    # Pack the parameters ONCE, off the per-call hot path.
    slab = jax.block_until_ready(pack_params(w1, b1, w2, b2))

    out = simple_model_forward(x, slab)
    jax.block_until_ready(out)

    # Pure-JAX reference check of forward semantics.
    ref = jnp.maximum(x @ w1 + b1[None, :], 0.0) @ w2 + b2[None, :]
    assert out.shape == (batch, OUT_F)
    assert jnp.allclose(out, ref, atol=1e-5, rtol=1e-5)

    print("KERNEL_OK")
</pallas_src>

<mosaic_0001>
module attributes {stable_mosaic.version = 11 : i64} {
  func.func @mlp_kernel(%arg0: i32, %arg1: memref<64x10xf32, #tpu.memory_space<vmem>>, %arg2: memref<160x128xf32, #tpu.memory_space<vmem>>, %arg3: memref<64x128xf32, #tpu.memory_space<vmem>>) attributes {dimension_semantics = [#tpu.dimension_semantics<parallel>], iteration_bounds = array<i64: 1>, scalar_prefetch = 0 : i64, scratch_operands = 0 : i64, tpu.core_type = #tpu.core_type<tc>, window_params = [{transform_indices = @transform_0, window_bounds = array<i64: 64, 10>}, {pipeline_mode = #tpu.pipeline_mode<synchronous>, transform_indices = @transform_1, window_bounds = array<i64: 160, 128>}, {transform_indices = @transform_2, window_bounds = array<i64: 64, 128>}]} {
    %c0 = arith.constant 0 : index
    %c0_0 = arith.constant 0 : index
    %0 = vector.load %arg1[%c0, %c0_0] : memref<64x10xf32, #tpu.memory_space<vmem>>, vector<64x10xf32>
    %c0_1 = arith.constant 0 : index
    %c0_2 = arith.constant 0 : index
    %1 = vector.load %arg2[%c0_1, %c0_2] : memref<160x128xf32, #tpu.memory_space<vmem>>, vector<10x128xf32>
    %c16 = arith.constant 16 : index
    %c0_3 = arith.constant 0 : index
    %2 = vector.load %arg2[%c16, %c0_3] : memref<160x128xf32, #tpu.memory_space<vmem>>, vector<1x128xf32>
    %c24 = arith.constant 24 : index
    %c0_4 = arith.constant 0 : index
    %3 = vector.load %arg2[%c24, %c0_4] : memref<160x128xf32, #tpu.memory_space<vmem>>, vector<128x128xf32>
    %c152 = arith.constant 152 : index
    %c0_5 = arith.constant 0 : index
    %4 = vector.load %arg2[%c152, %c0_5] : memref<160x128xf32, #tpu.memory_space<vmem>>, vector<1x128xf32>
    %cst = arith.constant dense<0.000000e+00> : vector<64x128xf32>
    %5 = tpu.matmul %0, %1, %cst {dimension_numbers = #tpu.dot_dimension_numbers<[1], [0], [0], [1], [0, 0, 1, 1], [], []>} : vector<64x10xf32>, vector<10x128xf32>, vector<64x128xf32> -> vector<64x128xf32>
    %6 = vector.broadcast %2 : vector<1x128xf32> to vector<64x128xf32>
    %7 = arith.addf %5, %6 : vector<64x128xf32>
    %cst_6 = arith.constant 0.000000e+00 : f32
    %8 = vector.broadcast %cst_6 : f32 to vector<64x128xf32>
    %9 = arith.maximumf %7, %8 : vector<64x128xf32>
    %cst_7 = arith.constant dense<0.000000e+00> : vector<64x128xf32>
    %10 = tpu.matmul %9, %3, %cst_7 {dimension_numbers = #tpu.dot_dimension_numbers<[1], [0], [0], [1], [0, 0, 1, 1], [], []>} : vector<64x128xf32>, vector<128x128xf32>, vector<64x128xf32> -> vector<64x128xf32>
    %11 = vector.broadcast %4 : vector<1x128xf32> to vector<64x128xf32>
    %12 = arith.addf %10, %11 : vector<64x128xf32>
    %c0_8 = arith.constant 0 : index
    %c0_9 = arith.constant 0 : index
    %13 = vector.load %arg3[%c0_8, %c0_9] : memref<64x128xf32, #tpu.memory_space<vmem>>, vector<64x128xf32>
    tpu.vector_store %arg3[%c0_8, %c0_9], %12 {strides = array<i32>} : memref<64x128xf32, #tpu.memory_space<vmem>>, vector<64x128xf32>,
    return
  }
  func.func @transform_0(%arg0: i32) -> (i32, i32) {
    %c0_i32 = arith.constant 0 : i32
    %c0_i32_0 = arith.constant 0 : i32
    return %arg0, %c0_i32 : i32, i32
  }
  func.func @transform_1(%arg0: i32) -> (i32, i32) {
    %c0_i32 = arith.constant 0 : i32
    %c0_i32_0 = arith.constant 0 : i32
    %c0_i32_1 = arith.constant 0 : i32
    return %c0_i32, %c0_i32_0 : i32, i32
  }
  func.func @transform_2(%arg0: i32) -> (i32, i32) {
    %c0_i32 = arith.constant 0 : i32
    %c0_i32_0 = arith.constant 0 : i32
    return %arg0, %c0_i32 : i32, i32
  }
}

</mosaic_0001>

<llo_original>
// kernel: tpu_custom_call.1
$region0: #{tpu_custom_call.1}
  #allocation0 [shape = 'u32[]', space=smem, size = 0x4, offset = 0x4, fixed_abs, tag = 'smem constant byte address 0x4 - core index']
  #allocation1 [shape = 'u32[144,128]{1,0:T(1,128)}', space=vmem, size = 0x12000, scoped, tag = 'internal scratch']
  %s0 = inlined_call_operand.vmem [shape: f32[64,10], index: 0, kind: input, shape index: {}]
  %s1 = inlined_call_operand.hbm [shape: f32[160,128], index: 1, kind: input, shape index: {}]
  %s2 = inlined_call_operand.hbm [shape: f32[64,128], index: 2, kind: output, shape index: {}]
  %s3 = sld [smem:[#allocation0]]
  $region22: #{tpu_custom_call.1} parent=0
    _
  %s5 = ssub.s32 1, %s3
  %s6 = scalar_select 0, %s5, %s3
  $region1: #{tpu_custom_call.1} parent=0
    #allocation2 [shape = 'u8[81920]{0}', space=vmem, size = 0x14000, scoped, tag = 'input window, operand 1, single buffered']
    #allocation3 [shape = 's32[1]{0}', space=sflag, size = 0x4, scoped, tag = 'scoped memory for tpu_custom_call.1']
    #allocation4 [shape = 's32[1]{0}', space=sflag, size = 0x4, scoped, tag = 'scoped memory for tpu_custom_call.1']
    #allocation5 [shape = 'u8[32768]{0}', space=vmem, size = 0x8000, scoped, tag = 'output window, operand 0, single buffered']
    %7 = vsyncpa [#allocation3], 0
    %8 = vsyncpa [#allocation4], 0
    // Predicated region
    $region2: #{tpu_custom_call.1} parent=1 // pred_check
      _
    $region3: #{tpu_custom_call.1} parent=1 // pred_check_branch
      %10 = sbr.rel (0) target = $region5
    $region4: #{tpu_custom_call.1} parent=1 // pred_region
      _
    $region5: #{tpu_custom_call.1} parent=1 // pred_fallthru
      _
    // Predicated region
    $region6: #{tpu_custom_call.1} parent=1 // pred_check
      _
    $region7: #{tpu_custom_call.1} parent=1 // pred_check_branch
      %12 = sbr.rel (0) target = $region9
    $region8: #{tpu_custom_call.1} parent=1 // pred_region
      %s14 = ssub.s32 2560, 2560
      %15 = vsyncadd [#allocation3], %s14
      %s16 = sshll.u32 [#allocation2], 4
      %s17 = int_to_ptr.vmem [resolvable:$true] %s16
      %22 = dma.hbm_to_vmem [thread:$0]  %s1, 2560, %s17, [#allocation3], 128, 128, 8
    $region9: #{tpu_custom_call.1} parent=1 // pred_fallthru
      _
    // Predicated region
    $region10: #{tpu_custom_call.1} parent=1 // pred_check
      _
    $region11: #{tpu_custom_call.1} parent=1 // pred_check_branch
      %24 = sbr.rel (0) target = $region13
    $region12: #{tpu_custom_call.1} parent=1 // pred_region
      %25 = dma.done [#allocation3], 2560
    $region13: #{tpu_custom_call.1} parent=1 // pred_fallthru
      _
    %v26 = vld [vmem:[%s0] sm:$0xff]
    %v27 = vld [vmem:[%s0 + $0x8] sm:$0xff]
    %v28 = vld [vmem:[%s0 + $0x10] sm:$0xff]
    %v29 = vld [vmem:[%s0 + $0x18] sm:$0xff]
    %v30 = vld [vmem:[%s0 + $0x20] sm:$0xff]
    %v31 = vld [vmem:[%s0 + $0x28] sm:$0xff]
    %v32 = vld [vmem:[%s0 + $0x30] sm:$0xff]
    %v33 = vld [vmem:[%s0 + $0x38] sm:$0xff]
    %v34 = vld [vmem:[#allocation2] sm:$0xff]
    %v35 = vld [vmem:[#allocation2 + $0x8] sm:$0x3]
    %v36 = vld [vmem:[#allocation2 + $0x10] sm:$0x1]
    %v37 = vld [vmem:[#allocation2 + $0x18] sm:$0xff]
    %v38 = vld [vmem:[#allocation2 + $0x20] sm:$0xff]
    %v39 = vld [vmem:[#allocation2 + $0x28] sm:$0xff]
    %v40 = vld [vmem:[#allocation2 + $0x30] sm:$0xff]
    %v41 = vld [vmem:[#allocation2 + $0x38] sm:$0xff]
    %v42 = vld [vmem:[#allocation2 + $0x40] sm:$0xff]
    %v43 = vld [vmem:[#allocation2 + $0x48] sm:$0xff]
    %v44 = vld [vmem:[#allocation2 + $0x50] sm:$0xff]
    %v45 = vld [vmem:[#allocation2 + $0x58] sm:$0xff]
    %v46 = vld [vmem:[#allocation2 + $0x60] sm:$0xff]
    %v47 = vld [vmem:[#allocation2 + $0x68] sm:$0xff]
    %v48 = vld [vmem:[#allocation2 + $0x70] sm:$0xff]
    %v49 = vld [vmem:[#allocation2 + $0x78] sm:$0xff]
    %v50 = vld [vmem:[#allocation2 + $0x80] sm:$0xff]
    %v51 = vld [vmem:[#allocation2 + $0x88] sm:$0xff]
    %v52 = vld [vmem:[#allocation2 + $0x90] sm:$0xff]
    %v53 = vld [vmem:[#allocation2 + $0x98] sm:$0x1]
    %v54 = vlaneseq
    %v55 = vshrl.u32 %v54, 7
    %v56 = vsub.s32 0, %v55
    %v57 = vrot.slane %v36, %v56
    %vm58 = vcmask 80896
    %v60 = vsel %vm58, %v26, 0
    %v63 = vsel %vm58, %v27, 0
    %v66 = vsel %vm58, %v28, 0
    %v69 = vsel %vm58, %v29, 0
    %v72 = vsel %vm58, %v30, 0
    %v75 = vsel %vm58, %v31, 0
    %v78 = vsel %vm58, %v32, 0
    %v81 = vsel %vm58, %v33, 0
    %vm83 = vcmask 1041408
    %v85 = vsel %vm83, %v35, 0
    %87 = vmatprep.subr.mxu0 0.0
    %88 = vmatpush1.msra.mxu0 %v34
    %89 = vmatprep.subr.mxu0 0.0
    %90 = vmatpush1.msra.mxu0 %v85
    %91 = vmatprep.subr.mxu0 0.0
    %92 = vmatpush1.msra.mxu0 0.0
    %93 = vmatprep.subr.mxu0 0.0
    %94 = vmatpush1.msra.mxu0 0.0
    %95 = vmatprep.subr.mxu0 0.0
    %96 = vmatpush1.msra.mxu0 0.0
    %97 = vmatprep.subr.mxu0 0.0
    %98 = vmatpush1.msra.mxu0 0.0
    %99 = vmatprep.subr.mxu0 0.0
    %100 = vmatpush1.msra.mxu0 0.0
    %101 = vmatprep.subr.mxu0 0.0
    %102 = vmatpush1.msra.mxu0 0.0
    %103 = vmatprep.subr.mxu0 0.0
    %104 = vmatpush1.msra.mxu0 0.0
    %105 = vmatprep.subr.mxu0 0.0
    %106 = vmatpush1.msra.mxu0 0.0
    %107 = vmatprep.subr.mxu0 0.0
    %108 = vmatpush1.msra.mxu0 0.0
    %109 = vmatprep.subr.mxu0 0.0
    %110 = vmatpush1.msra.mxu0 0.0
    %111 = vmatprep.subr.mxu0 0.0
    %112 = vmatpush1.msra.mxu0 0.0
    %113 = vmatprep.subr.mxu0 0.0
    %114 = vmatpush1.msra.mxu0 0.0
    %115 = vmatprep.subr.mxu0 0.0
    %116 = vmatpush1.msra.mxu0 0.0
    %117 = vmatprep.subr.mxu0 0.0
    %118 = vmatpush1.msra.mxu0 0.0
    %119 = vmatprep.subr.mxu0 0.0
    %120 = vmatpush1.msra.mxu0 0.0
    %121 = vmatprep.subr.mxu0 0.0
    %122 = vmatpush1.msra.mxu0 0.0
    %123 = vmatprep.subr.mxu0 0.0
    %124 = vmatpush1.msra.mxu0 0.0
    %125 = vmatprep.subr.mxu0 0.0
    %126 = vmatpush1.msra.mxu0 0.0
    %127 = vmatprep.subr.mxu0 0.0
    %128 = vmatpush1.msra.mxu0 0.0
    %129 = vmatprep.subr.mxu0 0.0
    %130 = vmatpush1.msra.mxu0 0.0
    %131 = vmatprep.subr.mxu0 0.0
    %132 = vmatpush1.msra.mxu0 0.0
    %133 = vmatprep.subr.mxu0 0.0
    %134 = vmatpush1.msra.mxu0 0.0
    %135 = vmatprep.subr.mxu0 0.0
    %136 = vmatpush1.msra.mxu0 0.0
    %137 = vmatprep.subr.mxu0 0.0
    %138 = vmatpush1.msra.mxu0 0.0
    %139 = vmatprep.subr.mxu0 0.0
    %140 = vmatpush1.msra.mxu0 0.0
    %141 = vmatprep.subr.mxu0 0.0
    %142 = vmatpush1.msra.mxu0 0.0
    %143 = vmatprep.subr.mxu0 0.0
    %144 = vmatpush1.msra.mxu0 0.0
    %145 = vmatprep.subr.mxu0 0.0
    %146 = vmatpush1.msra.mxu0 0.0
    %147 = vmatprep.subr.mxu0 0.0
    %148 = vmatpush1.msra.mxu0 0.0
    %149 = vmatprep.subr.mxu0 0.0
    %150 = vmatpush1.msra.mxu0 0.0
    %151 = vmatprep.mubr.f32.mxu0 0.0
    %152 = vmatmul.mubr.f32.gmra.mrb[0].mxu0 %v60
    %v153 = vpop.f32.mrb[0].mxu0
    %v154 = vadd.f32 %v57, %v153
    %v155 = vpop.f32.mrb[0].mxu0
    %156 = vmatprep.mubr.f32.mxu0 0.0
    %157 = vmatmul.mubr.f32.gmra.mrb[0].mxu0 %v63
    %v158 = vpop.f32.mrb[0].mxu0
    %v159 = vadd.f32 %v57, %v158
    %v160 = vpop.f32.mrb[0].mxu0
    %161 = vmatprep.mubr.f32.mxu0 0.0
    %162 = vmatmul.mubr.f32.gmra.mrb[0].mxu0 %v66
    %v163 = vpop.f32.mrb[0].mxu0
    %v164 = vadd.f32 %v57, %v163
    %v165 = vpop.f32.mrb[0].mxu0
    %166 = vmatprep.mubr.f32.mxu0 0.0
    %167 = vmatmul.mubr.f32.gmra.mrb[0].mxu0 %v69
    %v168 = vpop.f32.mrb[0].mxu0
    %v169 = vadd.f32 %v57, %v168
    %v170 = vpop.f32.mrb[0].mxu0
    %171 = vmatprep.mubr.f32.mxu0 0.0
    %172 = vmatmul.mubr.f32.gmra.mrb[0].mxu0 %v72
    %v173 = vpop.f32.mrb[0].mxu0
    %v174 = vadd.f32 %v57, %v173
    %v175 = vpop.f32.mrb[0].mxu0
    %176 = vmatprep.mubr.f32.mxu0 0.0
    %177 = vmatmul.mubr.f32.gmra.mrb[0].mxu0 %v75
    %v178 = vpop.f32.mrb[0].mxu0
    %v179 = vadd.f32 %v57, %v178
    %v180 = vpop.f32.mrb[0].mxu0
    %181 = vmatprep.mubr.f32.mxu0 0.0
    %182 = vmatmul.mubr.f32.gmra.mrb[0].mxu0 %v78
    %v183 = vpop.f32.mrb[0].mxu0
    %v184 = vadd.f32 %v57, %v183
    %v185 = vpop.f32.mrb[0].mxu0
    %186 = vmatprep.mubr.f32.mxu0 0.0
    %187 = vmatmul.mubr.f32.gmra.mrb[0].mxu0 %v81
    %v188 = vpop.f32.mrb[0].mxu0
    %v189 = vadd.f32 %v57, %v188
    %v190 = vpop.f32.mrb[0].mxu0
    %191 = vdwg.mxu0
    %v192 = vmax.f32 %v154, 0.0
    %v193 = vmax.f32 %v159, 0.0
    %v194 = vmax.f32 %v164, 0.0
    %v195 = vmax.f32 %v169, 0.0
    %v196 = vmax.f32 %v174, 0.0
    %v197 = vmax.f32 %v179, 0.0
    %v198 = vmax.f32 %v184, 0.0
    %v199 = vmax.f32 %v189, 0.0
    %v200 = vlaneseq
    %v201 = vshrl.u32 %v200, 7
    %v202 = vsub.s32 0, %v201
    %v203 = vrot.slane %v53, %v202
    %204 = vmatprep.subr.mxu0 0.0
    %205 = vmatpush1.msra.mxu0 %v37
    %206 = vmatprep.subr.mxu0 0.0
    %207 = vmatpush1.msra.mxu0 %v38
    %208 = vmatprep.subr.mxu0 0.0
    %209 = vmatpush1.msra.mxu0 %v39
    %210 = vmatprep.subr.mxu0 0.0
    %211 = vmatpush1.msra.mxu0 %v40
    %212 = vmatprep.subr.mxu0 0.0
    %213 = vmatpush1.msra.mxu0 %v41
    %214 = vmatprep.subr.mxu0 0.0
    %215 = vmatpush1.msra.mxu0 %v42
    %216 = vmatprep.subr.mxu0 0.0
    %217 = vmatpush1.msra.mxu0 %v43
    %218 = vmatprep.subr.mxu0 0.0
    %219 = vmatpush1.msra.mxu0 %v44
    %220 = vmatprep.subr.mxu0 0.0
    %221 = vmatpush1.msra.mxu0 %v45
    %222 = vmatprep.subr.mxu0 0.0
    %223 = vmatpush1.msra.mxu0 %v46
    %224 = vmatprep.subr.mxu0 0.0
    %225 = vmatpush1.msra.mxu0 %v47
    %226 = vmatprep.subr.mxu0 0.0
    %227 = vmatpush1.msra.mxu0 %v48
    %228 = vmatprep.subr.mxu0 0.0
    %229 = vmatpush1.msra.mxu0 %v49
    %230 = vmatprep.subr.mxu0 0.0
    %231 = vmatpush1.msra.mxu0 %v50
    %232 = vmatprep.subr.mxu0 0.0
    %233 = vmatpush1.msra.mxu0 %v51
    %234 = vmatprep.subr.mxu0 0.0
    %235 = vmatpush1.msra.mxu0 %v52
    %236 = vmatprep.subr.mxu0 0.0
    %237 = vmatpush1.msra.mxu0 0.0
    %238 = vmatprep.subr.mxu0 0.0
    %239 = vmatpush1.msra.mxu0 0.0
    %240 = vmatprep.subr.mxu0 0.0
    %241 = vmatpush1.msra.mxu0 0.0
    %242 = vmatprep.subr.mxu0 0.0
    %243 = vmatpush1.msra.mxu0 0.0
    %244 = vmatprep.subr.mxu0 0.0
    %245 = vmatpush1.msra.mxu0 0.0
    %246 = vmatprep.subr.mxu0 0.0
    %247 = vmatpush1.msra.mxu0 0.0
    %248 = vmatprep.subr.mxu0 0.0
    %249 = vmatpush1.msra.mxu0 0.0
    %250 = vmatprep.subr.mxu0 0.0
    %251 = vmatpush1.msra.mxu0 0.0
    %252 = vmatprep.subr.mxu0 0.0
    %253 = vmatpush1.msra.mxu0 0.0
    %254 = vmatprep.subr.mxu0 0.0
    %255 = vmatpush1.msra.mxu0 0.0
    %256 = vmatprep.subr.mxu0 0.0
    %257 = vmatpush1.msra.mxu0 0.0
    %258 = vmatprep.subr.mxu0 0.0
    %259 = vmatpush1.msra.mxu0 0.0
    %260 = vmatprep.subr.mxu0 0.0
    %261 = vmatpush1.msra.mxu0 0.0
    %262 = vmatprep.subr.mxu0 0.0
    %263 = vmatpush1.msra.mxu0 0.0
    %264 = vmatprep.subr.mxu0 0.0
    %265 = vmatpush1.msra.mxu0 0.0
    %266 = vmatprep.subr.mxu0 0.0
    %267 = vmatpush1.msra.mxu0 0.0
    %268 = vmatprep.mubr.f32.mxu0 0.0
    %269 = vmatmul.mubr.f32.gmra.mrb[0].mxu0 %v192
    %v270 = vpop.f32.mrb[0].mxu0
    %v271 = vadd.f32 %v203, %v270
    %v272 = vpop.f32.mrb[0].mxu0
    %273 = vmatprep.mubr.f32.mxu0 0.0
    %274 = vmatmul.mubr.f32.gmra.mrb[0].mxu0 %v193
    %v275 = vpop.f32.mrb[0].mxu0
    %v276 = vadd.f32 %v203, %v275
    %v277 = vpop.f32.mrb[0].mxu0
    %278 = vmatprep.mubr.f32.mxu0 0.0
    %279 = vmatmul.mubr.f32.gmra.mrb[0].mxu0 %v194
    %v280 = vpop.f32.mrb[0].mxu0
    %v281 = vadd.f32 %v203, %v280
    %v282 = vpop.f32.mrb[0].mxu0
    %283 = vmatprep.mubr.f32.mxu0 0.0
    %284 = vmatmul.mubr.f32.gmra.mrb[0].mxu0 %v195
    %v285 = vpop.f32.mrb[0].mxu0
    %v286 = vadd.f32 %v203, %v285
    %v287 = vpop.f32.mrb[0].mxu0
    %288 = vmatprep.mubr.f32.mxu0 0.0
    %289 = vmatmul.mubr.f32.gmra.mrb[0].mxu0 %v196
    %v290 = vpop.f32.mrb[0].mxu0
    %v291 = vadd.f32 %v203, %v290
    %v292 = vpop.f32.mrb[0].mxu0
    %293 = vmatprep.mubr.f32.mxu0 0.0
    %294 = vmatmul.mubr.f32.gmra.mrb[0].mxu0 %v197
    %v295 = vpop.f32.mrb[0].mxu0
    %v296 = vadd.f32 %v203, %v295
    %v297 = vpop.f32.mrb[0].mxu0
    %298 = vmatprep.mubr.f32.mxu0 0.0
    %299 = vmatmul.mubr.f32.gmra.mrb[0].mxu0 %v198
    %v300 = vpop.f32.mrb[0].mxu0
    %v301 = vadd.f32 %v203, %v300
    %v302 = vpop.f32.mrb[0].mxu0
    %303 = vmatprep.mubr.f32.mxu0 0.0
    %304 = vmatmul.mubr.f32.gmra.mrb[0].mxu0 %v199
    %v305 = vpop.f32.mrb[0].mxu0
    %v306 = vadd.f32 %v203, %v305
    %v307 = vpop.f32.mrb[0].mxu0
    %308 = vdwg.mxu0
    %309 = vst [vmem:[#allocation5] sm:$0xff] %v271
    %310 = vst [vmem:[#allocation5 + $0x8] sm:$0xff] %v276
    %311 = vst [vmem:[#allocation5 + $0x10] sm:$0xff] %v281
    %312 = vst [vmem:[#allocation5 + $0x18] sm:$0xff] %v286
    %313 = vst [vmem:[#allocation5 + $0x20] sm:$0xff] %v291
    %314 = vst [vmem:[#allocation5 + $0x28] sm:$0xff] %v296
    %315 = vst [vmem:[#allocation5 + $0x30] sm:$0xff] %v301
    %316 = vst [vmem:[#allocation5 + $0x38] sm:$0xff] %v306
    // Predicated region
    $region14: #{tpu_custom_call.1} parent=1 // pred_check
      _
    $region15: #{tpu_custom_call.1} parent=1 // pred_check_branch
      %318 = sbr.rel (0) target = $region17
    $region16: #{tpu_custom_call.1} parent=1 // pred_region
      %s320 = ssub.s32 1024, 1024
      %321 = vsyncadd [#allocation4], %s320
      %s322 = sshll.u32 [#allocation5], 4
      %s323 = int_to_ptr.vmem [resolvable:$true] %s322
      %328 = dma.vmem_to_hbm [thread:$0]  %s323, 1024, %s2, [#allocation4], 128, 128, 8
    $region17: #{tpu_custom_call.1} parent=1 // pred_fallthru
      _
    // Predicated region
    $region18: #{tpu_custom_call.1} parent=1 // pred_check
      _
    $region19: #{tpu_custom_call.1} parent=1 // pred_check_branch
      %330 = sbr.rel (0) target = $region21
    $region20: #{tpu_custom_call.1} parent=1 // pred_region
      %331 = dma.done [#allocation4], 1024
    $region21: #{tpu_custom_call.1} parent=1 // pred_fallthru
      _
    %332 = vsyncpa [#allocation3], 1
    %333 = vsyncpa [#allocation4], 1

</llo_original>
